<compile_context>
chip_gen: v5e
topology: v5e:2x2
jax: 0.10.0
libtpu: 0.0.40
codegen_flags: <defaults>
</compile_context>

<pallas_src>
import functools

import jax
import jax.numpy as jnp
from jax.experimental import pallas as pl
from jax.experimental.pallas import tpu as pltpu


def _round_up(x, m):
    return -(-x // m) * m


def _critic_kernel(s_ref, d_ref, ws_ref, bs_ref, wd_ref, bd_ref,
                   w1s_ref, w1d_ref, b1_ref, w2_ref, b2_ref, w3_ref, b3_ref,
                   out_ref, *, bpt, L, Lp, compute_dtype):
    cdt = compute_dtype
    Cs = s_ref.shape[1]
    Cd = d_ref.shape[1]
    TM = bpt * Lp

    # NCL -> rows-on-sublanes / channels-on-lanes, entirely in-kernel:
    # (bpt, C, Lp) --minor-dim transpose--> (bpt, Lp, C) --leading merge-->
    # (TM, C).  Lp % 8 == 0 so the merge is layout-trivial; no pre-kernel HBM
    # materialization of the concatenated/transposed input.
    xs = jnp.transpose(s_ref[...], (0, 2, 1)).reshape(TM, Cs).astype(cdt)
    xd = jnp.transpose(d_ref[...], (0, 2, 1)).reshape(TM, Cd).astype(cdt)

    # Encoders (1x1 convs).  Two separate dots -> no lane-concat relayout;
    # f32 accumulation + f32 bias add.
    hs = jnp.dot(xs, ws_ref[...], preferred_element_type=jnp.float32) + bs_ref[...]
    hd = jnp.dot(xd, wd_ref[...], preferred_element_type=jnp.float32) + bd_ref[...]

    # fc1 on the (virtual) channel concat: [hs|hd] @ W1 == hs @ W1[:H] + hd @ W1[H:].
    h1 = jnp.maximum(
        jnp.dot(hs.astype(cdt), w1s_ref[...], preferred_element_type=jnp.float32)
        + jnp.dot(hd.astype(cdt), w1d_ref[...], preferred_element_type=jnp.float32)
        + b1_ref[...], 0.0)                                           # (TM, 20)

    # fc2 + ReLU (f32 elementwise).
    h2 = jnp.maximum(
        jnp.dot(h1.astype(cdt), w2_ref[...], preferred_element_type=jnp.float32)
        + b2_ref[...], 0.0)                                           # (TM, 20)

    # Zero rows coming from sequence padding (only compiled in when L was
    # rounded up to a sublane multiple).
    if Lp != L:
        pos = jax.lax.broadcasted_iota(jnp.int32, (TM, 1), 0) % Lp
        h2 = jnp.where(pos < L, h2, 0.0)

    # Per-batch sequence reduction BEFORE the 1-channel projection: a
    # cross-sublane sum on the XLU (replaces the dense seg-matrix matmul).
    h2_sum = h2.reshape(bpt, Lp, 20).sum(axis=1)                      # (bpt, 20)

    # fc3 on the reduced activations; sum_l(h2 @ w3 + b3) == h2_sum @ w3 + L*b3.
    out_ref[...] = (jnp.dot(h2_sum.astype(cdt), w3_ref[...],
                            preferred_element_type=jnp.float32)
                    + float(L) * b3_ref[...])                         # (bpt, 1)


def state_critic_forward(static, dynamic, params, *, batches_per_tile=None,
                         compute_dtype=jnp.float32, target_rows=4096,
                         vmem_limit_bytes=48 * 1024 * 1024):
    """static: (B, static_size, L), dynamic: (B, dynamic_size, L) — PyTorch NCL."""
    static = jnp.asarray(static, jnp.float32)
    dynamic = jnp.asarray(dynamic, jnp.float32)
    B, Cs, L = static.shape
    Cd = dynamic.shape[1]
    H = params["ws"].shape[1]

    # Pad L up to a sublane multiple (padded positions masked out in-kernel).
    Lp = _round_up(L, 8)
    if Lp != L:
        static = jnp.pad(static, ((0, 0), (0, 0), (0, Lp - L)))
        dynamic = jnp.pad(dynamic, ((0, 0), (0, 0), (0, Lp - L)))

    # Tile selection: whole batches per tile, aiming for >= target_rows rows
    # per grid step; bpt a multiple of 8 (for the (bpt, 1) output block) unless
    # a single tile covers the whole batch.
    if batches_per_tile is None:
        bpt = _round_up(max(1, pl.cdiv(target_rows, Lp)), 8)
        if bpt >= B:
            bpt = B
    else:
        bpt = batches_per_tile
    B_pad = _round_up(B, bpt)
    assert bpt % 8 == 0 or bpt == B_pad, (
        "batches_per_tile must be a multiple of 8 or cover the whole batch")
    if B_pad != B:   # pad with junk batches; their outputs are sliced off below
        static = jnp.pad(static, ((0, B_pad - B), (0, 0), (0, 0)))
        dynamic = jnp.pad(dynamic, ((0, B_pad - B), (0, 0), (0, 0)))
    num_tiles = B_pad // bpt

    cdt = compute_dtype
    ws = params["ws"].astype(cdt)            # (Cs, H)
    wd = params["wd"].astype(cdt)            # (Cd, H)
    w1s = params["w1"][:H].astype(cdt)       # (H, 20)  -> multiplies static half
    w1d = params["w1"][H:].astype(cdt)       # (H, 20)  -> multiplies dynamic half
    w2 = params["w2"].astype(cdt)            # (20, 20)
    w3 = params["w3"].astype(cdt)            # (20, 1)
    bs, bd = params["bs"], params["bd"]      # biases stay f32
    b1, b2, b3 = params["b1"], params["b2"], params["b3"]

    const2 = lambda i: (0, 0)                # weights stay VMEM-resident
    in_specs = [
        pl.BlockSpec((bpt, Cs, Lp), lambda i: (i, 0, 0)),   # streamed static
        pl.BlockSpec((bpt, Cd, Lp), lambda i: (i, 0, 0)),   # streamed dynamic
        pl.BlockSpec((Cs, H), const2), pl.BlockSpec((1, H), const2),
        pl.BlockSpec((Cd, H), const2), pl.BlockSpec((1, H), const2),
        pl.BlockSpec((H, 20), const2), pl.BlockSpec((H, 20), const2),
        pl.BlockSpec((1, 20), const2),
        pl.BlockSpec((20, 20), const2), pl.BlockSpec((1, 20), const2),
        pl.BlockSpec((20, 1), const2), pl.BlockSpec((1, 1), const2),
    ]

    out = pl.pallas_call(
        functools.partial(_critic_kernel, bpt=bpt, L=L, Lp=Lp,
                          compute_dtype=cdt),
        out_shape=jax.ShapeDtypeStruct((B_pad, 1), jnp.float32),
        grid=(num_tiles,),
        in_specs=in_specs,
        out_specs=pl.BlockSpec((bpt, 1), lambda i: (i, 0)),
        compiler_params=pltpu.CompilerParams(
            dimension_semantics=("parallel",),
            vmem_limit_bytes=vmem_limit_bytes),
    )(static, dynamic, ws, bs, wd, bd, w1s, w1d, b1, w2, b2, w3, b3)

    return out[:B]


def xavier_uniform(key, out_ch, in_ch):
    """Matches nn.init.xavier_uniform_ on a Conv1d weight (out, in, 1);
    returned transposed as (in, out) so the kernel does x @ W."""
    bound = (6.0 / (in_ch + out_ch)) ** 0.5
    w = jax.random.uniform(key, (out_ch, in_ch), jnp.float32, -bound, bound)
    return w.T  # (in, out)


def make_params(key, static_size, dynamic_size, hidden_size):
    ks = jax.random.split(key, 10)

    def bias(k, n, fan_in):
        b = 1.0 / (fan_in ** 0.5)
        return jax.random.uniform(k, (1, n), jnp.float32, -b, b)

    return {
        "ws": xavier_uniform(ks[0], hidden_size, static_size),
        "bs": bias(ks[1], hidden_size, static_size),
        "wd": xavier_uniform(ks[2], hidden_size, dynamic_size),
        "bd": bias(ks[3], hidden_size, dynamic_size),
        "w1": xavier_uniform(ks[4], 20, hidden_size * 2),   # (2H, 20)
        "b1": bias(ks[5], 20, hidden_size * 2),
        "w2": xavier_uniform(ks[6], 20, 20),
        "b2": bias(ks[7], 20, 20),
        "w3": xavier_uniform(ks[8], 1, 20),
        "b3": bias(ks[9], 1, 20),
    }


def reference_forward(static, dynamic, params):
    """Pure-JAX reference with identical math (sanity check)."""
    def conv1x1(x_ncl, w_io, b_1o):  # x: (B, Cin, L)
        return jnp.einsum("bcl,co->bol", x_ncl, w_io) + b_1o.reshape(1, -1, 1)
    sh = conv1x1(static, params["ws"], params["bs"])
    dh = conv1x1(dynamic, params["wd"], params["bd"])
    h = jnp.concatenate([sh, dh], axis=1)
    o = jax.nn.relu(conv1x1(h, params["w1"], params["b1"]))
    o = jax.nn.relu(conv1x1(o, params["w2"], params["b2"]))
    o = conv1x1(o, params["w3"], params["b3"]).sum(axis=2)
    return o


if __name__ == "__main__":
    key = jax.random.PRNGKey(0)
    k_s, k_d, k_p = jax.random.split(key, 3)

    static_size, dynamic_size, hidden_size = 4, 4, 32
    params = make_params(k_p, static_size, dynamic_size, hidden_size)

    # Case 1: spec shapes (B=2, L=16), f32, auto tiling (single tile).
    B, L = 2, 16
    s1 = jax.random.normal(k_s, (B, static_size, L), jnp.float32)
    d1 = jax.random.normal(k_d, (B, dynamic_size, L), jnp.float32)
    fwd1 = jax.jit(functools.partial(state_critic_forward, params=params))
    out1 = jax.block_until_ready(fwd1(s1, d1))
    ref1 = reference_forward(s1, d1, params)
    assert out1.shape == (B, 1), out1.shape
    assert jnp.allclose(out1, ref1, atol=1e-3, rtol=1e-3), (out1, ref1)

    # Case 2: awkward batch / sequence length (B=10, L=12) with explicit
    # batches_per_tile=8 -> exercises batch padding, sequence padding + mask,
    # and the multi-tile pipelined "parallel" grid path.
    B2, L2 = 10, 12
    s2 = jax.random.normal(jax.random.PRNGKey(1), (B2, static_size, L2), jnp.float32)
    d2 = jax.random.normal(jax.random.PRNGKey(2), (B2, dynamic_size, L2), jnp.float32)
    fwd2 = jax.jit(functools.partial(state_critic_forward, params=params,
                                     batches_per_tile=8))
    out2 = jax.block_until_ready(fwd2(s2, d2))
    ref2 = reference_forward(s2, d2, params)
    assert out2.shape == (B2, 1), out2.shape
    assert jnp.allclose(out2, ref2, atol=1e-3, rtol=1e-3), (out2, ref2)

    # Case 3: bf16 MXU operands (f32 accumulate / elementwise), loose tolerance.
    fwd3 = jax.jit(functools.partial(state_critic_forward, params=params,
                                     batches_per_tile=8,
                                     compute_dtype=jnp.bfloat16))
    out3 = jax.block_until_ready(fwd3(s2, d2))
    assert jnp.allclose(out3, ref2, atol=0.2, rtol=0.05), (out3, ref2)

    print("KERNEL_OK")
</pallas_src>

<mosaic_0001>
module attributes {stable_mosaic.version = 11 : i64} {
  func.func @_critic_kernel(%arg0: i32, %arg1: memref<2x4x16xf32, #tpu.memory_space<vmem>>, %arg2: memref<2x4x16xf32, #tpu.memory_space<vmem>>, %arg3: memref<4x32xf32, #tpu.memory_space<vmem>>, %arg4: memref<1x32xf32, #tpu.memory_space<vmem>>, %arg5: memref<4x32xf32, #tpu.memory_space<vmem>>, %arg6: memref<1x32xf32, #tpu.memory_space<vmem>>, %arg7: memref<32x20xf32, #tpu.memory_space<vmem>>, %arg8: memref<32x20xf32, #tpu.memory_space<vmem>>, %arg9: memref<1x20xf32, #tpu.memory_space<vmem>>, %arg10: memref<20x20xf32, #tpu.memory_space<vmem>>, %arg11: memref<1x20xf32, #tpu.memory_space<vmem>>, %arg12: memref<20x1xf32, #tpu.memory_space<vmem>>, %arg13: memref<1x1xf32, #tpu.memory_space<vmem>>, %arg14: memref<2x1xf32, #tpu.memory_space<vmem>>) attributes {dimension_semantics = [#tpu.dimension_semantics<parallel>], iteration_bounds = array<i64: 1>, scalar_prefetch = 0 : i64, scratch_operands = 0 : i64, tpu.core_type = #tpu.core_type<tc>, window_params = [{transform_indices = @transform_0, window_bounds = array<i64: 2, 4, 16>}, {transform_indices = @transform_1, window_bounds = array<i64: 2, 4, 16>}, {pipeline_mode = #tpu.pipeline_mode<synchronous>, transform_indices = @transform_2, window_bounds = array<i64: 4, 32>}, {pipeline_mode = #tpu.pipeline_mode<synchronous>, transform_indices = @transform_3, window_bounds = array<i64: 1, 32>}, {pipeline_mode = #tpu.pipeline_mode<synchronous>, transform_indices = @transform_4, window_bounds = array<i64: 4, 32>}, {pipeline_mode = #tpu.pipeline_mode<synchronous>, transform_indices = @transform_5, window_bounds = array<i64: 1, 32>}, {pipeline_mode = #tpu.pipeline_mode<synchronous>, transform_indices = @transform_6, window_bounds = array<i64: 32, 20>}, {pipeline_mode = #tpu.pipeline_mode<synchronous>, transform_indices = @transform_7, window_bounds = array<i64: 32, 20>}, {pipeline_mode = #tpu.pipeline_mode<synchronous>, transform_indices = @transform_8, window_bounds = array<i64: 1, 20>}, {pipeline_mode = #tpu.pipeline_mode<synchronous>, transform_indices = @transform_9, window_bounds = array<i64: 20, 20>}, {pipeline_mode = #tpu.pipeline_mode<synchronous>, transform_indices = @transform_10, window_bounds = array<i64: 1, 20>}, {pipeline_mode = #tpu.pipeline_mode<synchronous>, transform_indices = @transform_11, window_bounds = array<i64: 20, 1>}, {pipeline_mode = #tpu.pipeline_mode<synchronous>, transform_indices = @transform_12, window_bounds = array<i64: 1, 1>}, {transform_indices = @transform_13, window_bounds = array<i64: 2, 1>}]} {
    %c0 = arith.constant 0 : index
    %c0_0 = arith.constant 0 : index
    %c0_1 = arith.constant 0 : index
    %0 = vector.load %arg1[%c0, %c0_0, %c0_1] : memref<2x4x16xf32, #tpu.memory_space<vmem>>, vector<2x4x16xf32>
    %1 = tpu.transpose %0, [0, 2, 1] : vector<2x4x16xf32> -> vector<2x16x4xf32>
    %2 = vector.shape_cast %1 : vector<2x16x4xf32> to vector<32x4xf32>
    %c0_2 = arith.constant 0 : index
    %c0_3 = arith.constant 0 : index
    %c0_4 = arith.constant 0 : index
    %3 = vector.load %arg2[%c0_2, %c0_3, %c0_4] : memref<2x4x16xf32, #tpu.memory_space<vmem>>, vector<2x4x16xf32>
    %4 = tpu.transpose %3, [0, 2, 1] : vector<2x4x16xf32> -> vector<2x16x4xf32>
    %5 = vector.shape_cast %4 : vector<2x16x4xf32> to vector<32x4xf32>
    %c0_5 = arith.constant 0 : index
    %c0_6 = arith.constant 0 : index
    %6 = vector.load %arg3[%c0_5, %c0_6] : memref<4x32xf32, #tpu.memory_space<vmem>>, vector<4x32xf32>
    %cst = arith.constant dense<0.000000e+00> : vector<32x32xf32>
    %7 = tpu.matmul %2, %6, %cst {dimension_numbers = #tpu.dot_dimension_numbers<[1], [0], [0], [1], [0, 0, 1, 1], [], []>} : vector<32x4xf32>, vector<4x32xf32>, vector<32x32xf32> -> vector<32x32xf32>
    %c0_7 = arith.constant 0 : index
    %c0_8 = arith.constant 0 : index
    %8 = vector.load %arg4[%c0_7, %c0_8] : memref<1x32xf32, #tpu.memory_space<vmem>>, vector<1x32xf32>
    %9 = vector.broadcast %8 : vector<1x32xf32> to vector<32x32xf32>
    %10 = arith.addf %7, %9 : vector<32x32xf32>
    %c0_9 = arith.constant 0 : index
    %c0_10 = arith.constant 0 : index
    %11 = vector.load %arg5[%c0_9, %c0_10] : memref<4x32xf32, #tpu.memory_space<vmem>>, vector<4x32xf32>
    %cst_11 = arith.constant dense<0.000000e+00> : vector<32x32xf32>
    %12 = tpu.matmul %5, %11, %cst_11 {dimension_numbers = #tpu.dot_dimension_numbers<[1], [0], [0], [1], [0, 0, 1, 1], [], []>} : vector<32x4xf32>, vector<4x32xf32>, vector<32x32xf32> -> vector<32x32xf32>
    %c0_12 = arith.constant 0 : index
    %c0_13 = arith.constant 0 : index
    %13 = vector.load %arg6[%c0_12, %c0_13] : memref<1x32xf32, #tpu.memory_space<vmem>>, vector<1x32xf32>
    %14 = vector.broadcast %13 : vector<1x32xf32> to vector<32x32xf32>
    %15 = arith.addf %12, %14 : vector<32x32xf32>
    %c0_14 = arith.constant 0 : index
    %c0_15 = arith.constant 0 : index
    %16 = vector.load %arg7[%c0_14, %c0_15] : memref<32x20xf32, #tpu.memory_space<vmem>>, vector<32x20xf32>
    %cst_16 = arith.constant dense<0.000000e+00> : vector<32x20xf32>
    %17 = tpu.matmul %10, %16, %cst_16 {dimension_numbers = #tpu.dot_dimension_numbers<[1], [0], [0], [1], [0, 0, 1, 1], [], []>} : vector<32x32xf32>, vector<32x20xf32>, vector<32x20xf32> -> vector<32x20xf32>
    %c0_17 = arith.constant 0 : index
    %c0_18 = arith.constant 0 : index
    %18 = vector.load %arg8[%c0_17, %c0_18] : memref<32x20xf32, #tpu.memory_space<vmem>>, vector<32x20xf32>
    %cst_19 = arith.constant dense<0.000000e+00> : vector<32x20xf32>
    %19 = tpu.matmul %15, %18, %cst_19 {dimension_numbers = #tpu.dot_dimension_numbers<[1], [0], [0], [1], [0, 0, 1, 1], [], []>} : vector<32x32xf32>, vector<32x20xf32>, vector<32x20xf32> -> vector<32x20xf32>
    %20 = arith.addf %17, %19 : vector<32x20xf32>
    %c0_20 = arith.constant 0 : index
    %c0_21 = arith.constant 0 : index
    %21 = vector.load %arg9[%c0_20, %c0_21] : memref<1x20xf32, #tpu.memory_space<vmem>>, vector<1x20xf32>
    %22 = vector.broadcast %21 : vector<1x20xf32> to vector<32x20xf32>
    %23 = arith.addf %20, %22 : vector<32x20xf32>
    %cst_22 = arith.constant 0.000000e+00 : f32
    %24 = vector.broadcast %cst_22 : f32 to vector<32x20xf32>
    %25 = arith.maximumf %23, %24 : vector<32x20xf32>
    %c0_23 = arith.constant 0 : index
    %c0_24 = arith.constant 0 : index
    %26 = vector.load %arg10[%c0_23, %c0_24] : memref<20x20xf32, #tpu.memory_space<vmem>>, vector<20x20xf32>
    %cst_25 = arith.constant dense<0.000000e+00> : vector<32x20xf32>
    %27 = tpu.matmul %25, %26, %cst_25 {dimension_numbers = #tpu.dot_dimension_numbers<[1], [0], [0], [1], [0, 0, 1, 1], [], []>} : vector<32x20xf32>, vector<20x20xf32>, vector<32x20xf32> -> vector<32x20xf32>
    %c0_26 = arith.constant 0 : index
    %c0_27 = arith.constant 0 : index
    %28 = vector.load %arg11[%c0_26, %c0_27] : memref<1x20xf32, #tpu.memory_space<vmem>>, vector<1x20xf32>
    %29 = vector.broadcast %28 : vector<1x20xf32> to vector<32x20xf32>
    %30 = arith.addf %27, %29 : vector<32x20xf32>
    %cst_28 = arith.constant 0.000000e+00 : f32
    %31 = vector.broadcast %cst_28 : f32 to vector<32x20xf32>
    %32 = arith.maximumf %30, %31 : vector<32x20xf32>
    %33 = vector.shape_cast %32 : vector<32x20xf32> to vector<2x16x20xf32>
    %cst_29 = arith.constant dense<0.000000e+00> : vector<2x20xf32>
    %34 = vector.multi_reduction <add>, %33, %cst_29 [1] : vector<2x16x20xf32> to vector<2x20xf32>
    %c0_30 = arith.constant 0 : index
    %c0_31 = arith.constant 0 : index
    %35 = vector.load %arg12[%c0_30, %c0_31] : memref<20x1xf32, #tpu.memory_space<vmem>>, vector<20x1xf32>
    %cst_32 = arith.constant dense<0.000000e+00> : vector<2x1xf32>
    %36 = tpu.matmul %34, %35, %cst_32 {dimension_numbers = #tpu.dot_dimension_numbers<[1], [0], [0], [1], [0, 0, 1, 1], [], []>} : vector<2x20xf32>, vector<20x1xf32>, vector<2x1xf32> -> vector<2x1xf32>
    %c0_33 = arith.constant 0 : index
    %c0_34 = arith.constant 0 : index
    %37 = vector.load %arg13[%c0_33, %c0_34] : memref<1x1xf32, #tpu.memory_space<vmem>>, vector<1x1xf32>
    %cst_35 = arith.constant 1.600000e+01 : f32
    %38 = vector.broadcast %cst_35 : f32 to vector<1x1xf32>
    %39 = arith.mulf %38, %37 : vector<1x1xf32>
    %40 = vector.broadcast %39 : vector<1x1xf32> to vector<2x1xf32>
    %41 = arith.addf %36, %40 : vector<2x1xf32>
    %c0_36 = arith.constant 0 : index
    %c0_37 = arith.constant 0 : index
    %42 = vector.load %arg14[%c0_36, %c0_37] : memref<2x1xf32, #tpu.memory_space<vmem>>, vector<2x1xf32>
    tpu.vector_store %arg14[%c0_36, %c0_37], %41 {strides = array<i32>} : memref<2x1xf32, #tpu.memory_space<vmem>>, vector<2x1xf32>,
    return
  }
  func.func @transform_0(%arg0: i32) -> (i32, i32, i32) {
    %c0_i32 = arith.constant 0 : i32
    %c0_i32_0 = arith.constant 0 : i32
    %c0_i32_1 = arith.constant 0 : i32
    return %arg0, %c0_i32, %c0_i32_0 : i32, i32, i32
  }
  func.func @transform_1(%arg0: i32) -> (i32, i32, i32) {
    %c0_i32 = arith.constant 0 : i32
    %c0_i32_0 = arith.constant 0 : i32
    %c0_i32_1 = arith.constant 0 : i32
    return %arg0, %c0_i32, %c0_i32_0 : i32, i32, i32
  }
  func.func @transform_2(%arg0: i32) -> (i32, i32) {
    %c0_i32 = arith.constant 0 : i32
    %c0_i32_0 = arith.constant 0 : i32
    %c0_i32_1 = arith.constant 0 : i32
    return %c0_i32, %c0_i32_0 : i32, i32
  }
  func.func @transform_3(%arg0: i32) -> (i32, i32) {
    %c0_i32 = arith.constant 0 : i32
    %c0_i32_0 = arith.constant 0 : i32
    %c0_i32_1 = arith.constant 0 : i32
    return %c0_i32, %c0_i32_0 : i32, i32
  }
  func.func @transform_4(%arg0: i32) -> (i32, i32) {
    %c0_i32 = arith.constant 0 : i32
    %c0_i32_0 = arith.constant 0 : i32
    %c0_i32_1 = arith.constant 0 : i32
    return %c0_i32, %c0_i32_0 : i32, i32
  }
  func.func @transform_5(%arg0: i32) -> (i32, i32) {
    %c0_i32 = arith.constant 0 : i32
    %c0_i32_0 = arith.constant 0 : i32
    %c0_i32_1 = arith.constant 0 : i32
    return %c0_i32, %c0_i32_0 : i32, i32
  }
  func.func @transform_6(%arg0: i32) -> (i32, i32) {
    %c0_i32 = arith.constant 0 : i32
    %c0_i32_0 = arith.constant 0 : i32
    %c0_i32_1 = arith.constant 0 : i32
    return %c0_i32, %c0_i32_0 : i32, i32
  }
  func.func @transform_7(%arg0: i32) -> (i32, i32) {
    %c0_i32 = arith.constant 0 : i32
    %c0_i32_0 = arith.constant 0 : i32
    %c0_i32_1 = arith.constant 0 : i32
    return %c0_i32, %c0_i32_0 : i32, i32
  }
  func.func @transform_8(%arg0: i32) -> (i32, i32) {
    %c0_i32 = arith.constant 0 : i32
    %c0_i32_0 = arith.constant 0 : i32
    %c0_i32_1 = arith.constant 0 : i32
    return %c0_i32, %c0_i32_0 : i32, i32
  }
  func.func @transform_9(%arg0: i32) -> (i32, i32) {
    %c0_i32 = arith.constant 0 : i32
    %c0_i32_0 = arith.constant 0 : i32
    %c0_i32_1 = arith.constant 0 : i32
    return %c0_i32, %c0_i32_0 : i32, i32
  }
  func.func @transform_10(%arg0: i32) -> (i32, i32) {
    %c0_i32 = arith.constant 0 : i32
    %c0_i32_0 = arith.constant 0 : i32
    %c0_i32_1 = arith.constant 0 : i32
    return %c0_i32, %c0_i32_0 : i32, i32
  }
  func.func @transform_11(%arg0: i32) -> (i32, i32) {
    %c0_i32 = arith.constant 0 : i32
    %c0_i32_0 = arith.constant 0 : i32
    %c0_i32_1 = arith.constant 0 : i32
    return %c0_i32, %c0_i32_0 : i32, i32
  }
  func.func @transform_12(%arg0: i32) -> (i32, i32) {
    %c0_i32 = arith.constant 0 : i32
    %c0_i32_0 = arith.constant 0 : i32
    %c0_i32_1 = arith.constant 0 : i32
    return %c0_i32, %c0_i32_0 : i32, i32
  }
  func.func @transform_13(%arg0: i32) -> (i32, i32) {
    %c0_i32 = arith.constant 0 : i32
    %c0_i32_0 = arith.constant 0 : i32
    return %arg0, %c0_i32 : i32, i32
  }
}

</mosaic_0001>

<llo_original>
// kernel: state_critic_forward.1
$region0: #{state_critic_forward.1}
  #allocation0 [shape = 'u32[]', space=smem, size = 0x4, offset = 0x4, fixed_abs, tag = 'smem constant byte address 0x4 - core index']
  #allocation1 [shape = 'u32[72,128]{1,0:T(1,128)}', space=vmem, size = 0x9000, scoped, tag = 'internal scratch']
  #allocation2 [shape = 'f32[1,1]{1,0:T(1,128)S(1)}', space=vmem, size = 0x200, scoped, tag = 'scoped memory for state_critic_forward.1']
  %s0 = inlined_call_operand.hbm [shape: f32[2,4,16], index: 0, kind: input, shape index: {}]
  %s1 = inlined_call_operand.hbm [shape: f32[2,4,16], index: 1, kind: input, shape index: {}]
  %s2 = inlined_call_operand.hbm [shape: f32[4,32], index: 2, kind: input, shape index: {}]
  %s3 = inlined_call_operand.hbm [shape: f32[1,32], index: 3, kind: input, shape index: {}]
  %s4 = inlined_call_operand.hbm [shape: f32[4,32], index: 4, kind: input, shape index: {}]
  %s5 = inlined_call_operand.vmem [shape: f32[1,32], index: 5, kind: input, shape index: {}]
  %s6 = inlined_call_operand.hbm [shape: f32[32,20], index: 6, kind: input, shape index: {}]
  %s7 = inlined_call_operand.hbm [shape: f32[32,20], index: 7, kind: input, shape index: {}]
  %s8 = inlined_call_operand.vmem [shape: f32[1,20], index: 8, kind: input, shape index: {}]
  %s9 = inlined_call_operand.hbm [shape: f32[20,20], index: 9, kind: input, shape index: {}]
  %s10 = inlined_call_operand.vmem [shape: f32[1,20], index: 10, kind: input, shape index: {}]
  %s11 = inlined_call_operand.hbm [shape: f32[20,1], index: 11, kind: input, shape index: {}]
  %s12 = inlined_call_operand.<no memory space> [shape: f32[1,1], index: 12, kind: input, shape index: {}]
  %s13 = inlined_call_operand.vmem [shape: f32[2,1], index: 13, kind: output, shape index: {}]
  %s14 = sld [smem:[#allocation0]]
  $region98: #{state_critic_forward.1} parent=0
    _
  %s16 = ssub.s32 1, %s14
  %s17 = scalar_select 0, %s16, %s14
  %v18 = vstv %s12
  %19 = vst [vmem:[#allocation2] sm:$0x1] %v18
  $region1: #{state_critic_forward.1} parent=0
    #allocation3 [shape = 'u8[4096]{0}', space=vmem, size = 0x1000, scoped, tag = 'input window, operand 0, single buffered']
    #allocation4 [shape = 's32[1]{0}', space=sflag, size = 0x4, scoped, tag = 'scoped memory for state_critic_forward.1']
    #allocation5 [shape = 'u8[4096]{0}', space=vmem, size = 0x1000, scoped, tag = 'input window, operand 1, single buffered']
    #allocation6 [shape = 's32[1]{0}', space=sflag, size = 0x4, scoped, tag = 'scoped memory for state_critic_forward.1']
    #allocation7 [shape = 'u8[2048]{0}', space=vmem, size = 0x800, scoped, tag = 'input window, operand 2, single buffered']
    #allocation8 [shape = 'u8[512]{0}', space=vmem, size = 0x400, scoped, tag = 'input window, operand 3, single buffered']
    #allocation9 [shape = 's32[1]{0}', space=sflag, size = 0x4, scoped, tag = 'scoped memory for state_critic_forward.1']
    #allocation10 [shape = 'u8[2048]{0}', space=vmem, size = 0x800, scoped, tag = 'input window, operand 4, single buffered']
    #allocation11 [shape = 'u8[16384]{0}', space=vmem, size = 0x4000, scoped, tag = 'input window, operand 6, single buffered']
    #allocation12 [shape = 's32[1]{0}', space=sflag, size = 0x4, scoped, tag = 'scoped memory for state_critic_forward.1']
    #allocation13 [shape = 'u8[16384]{0}', space=vmem, size = 0x4000, scoped, tag = 'input window, operand 7, single buffered']
    #allocation14 [shape = 'u8[12288]{0}', space=vmem, size = 0x3000, scoped, tag = 'input window, operand 9, single buffered']
    #allocation15 [shape = 's32[1]{0}', space=sflag, size = 0x4, scoped, tag = 'scoped memory for state_critic_forward.1']
    #allocation16 [shape = 'u8[12288]{0}', space=vmem, size = 0x3000, scoped, tag = 'input window, operand 11, single buffered']
    %20 = vsyncpa [#allocation4], 0
    %21 = vsyncpa [#allocation6], 0
    %22 = vsyncpa [#allocation9], 0
    %23 = vsyncpa [#allocation12], 0
    %24 = vsyncpa [#allocation15], 0
    // Predicated region
    $region2: #{state_critic_forward.1} parent=1 // pred_check
      _
    $region3: #{state_critic_forward.1} parent=1 // pred_check_branch
      %26 = sbr.rel (0) target = $region5
    $region4: #{state_critic_forward.1} parent=1 // pred_region
      %28 = vsyncadd [#allocation4], 0
      %s29 = sshll.u32 %s0, 4
      %s30 = int_to_ptr.hbm [resolvable:$true] %s29
      %s31 = sshll.u32 [#allocation3], 4
      %s32 = int_to_ptr.vmem [resolvable:$true] %s31
      %37 = dma.hbm_to_vmem [thread:$0]  %s30, 128, %s32, [#allocation4], 64, 64, 4
    $region5: #{state_critic_forward.1} parent=1 // pred_fallthru
      _
    // Predicated region
    $region6: #{state_critic_forward.1} parent=1 // pred_check
      _
    $region7: #{state_critic_forward.1} parent=1 // pred_check_branch
      %39 = sbr.rel (0) target = $region9
    $region8: #{state_critic_forward.1} parent=1 // pred_region
      %41 = vsyncadd [#allocation6], 0
      %s42 = sshll.u32 %s1, 4
      %s43 = int_to_ptr.hbm [resolvable:$true] %s42
      %s44 = sshll.u32 [#allocation5], 4
      %s45 = int_to_ptr.vmem [resolvable:$true] %s44
      %50 = dma.hbm_to_vmem [thread:$0]  %s43, 128, %s45, [#allocation6], 64, 64, 4
    $region9: #{state_critic_forward.1} parent=1 // pred_fallthru
      _
    // Predicated region
    $region10: #{state_critic_forward.1} parent=1 // pred_check
      _
    $region11: #{state_critic_forward.1} parent=1 // pred_check_branch
      %52 = sbr.rel (0) target = $region13
    $region12: #{state_critic_forward.1} parent=1 // pred_region
      %54 = vsyncadd [#allocation6], 0
      %s56 = sshll.u32 %s2, 4
      %s57 = int_to_ptr.hbm [resolvable:$true] %s56
      %s58 = sshll.u32 [#allocation7], 4
      %s59 = int_to_ptr.vmem [resolvable:$true] %s58
      %61 = dma.hbm_to_vmem [thread:$0]  %s57, 64, %s59, [#allocation6]
    $region13: #{state_critic_forward.1} parent=1 // pred_fallthru
      _
    // Predicated region
    $region14: #{state_critic_forward.1} parent=1 // pred_check
      _
    $region15: #{state_critic_forward.1} parent=1 // pred_check_branch
      %63 = sbr.rel (0) target = $region17
    $region16: #{state_critic_forward.1} parent=1 // pred_region
      %65 = vsyncadd [#allocation9], 0
      %s67 = sshll.u32 %s3, 4
      %s68 = int_to_ptr.hbm [resolvable:$true] %s67
      %s69 = sshll.u32 [#allocation8], 4
      %s70 = int_to_ptr.vmem [resolvable:$true] %s69
      %72 = dma.hbm_to_vmem [thread:$0]  %s68, 16, %s70, [#allocation9]
    $region17: #{state_critic_forward.1} parent=1 // pred_fallthru
      _
    // Predicated region
    $region18: #{state_critic_forward.1} parent=1 // pred_check
      _
    $region19: #{state_critic_forward.1} parent=1 // pred_check_branch
      %74 = sbr.rel (0) target = $region21
    $region20: #{state_critic_forward.1} parent=1 // pred_region
      %76 = vsyncadd [#allocation9], 0
      %s78 = sshll.u32 %s4, 4
      %s79 = int_to_ptr.hbm [resolvable:$true] %s78
      %s80 = sshll.u32 [#allocation10], 4
      %s81 = int_to_ptr.vmem [resolvable:$true] %s80
      %83 = dma.hbm_to_vmem [thread:$0]  %s79, 64, %s81, [#allocation9]
    $region21: #{state_critic_forward.1} parent=1 // pred_fallthru
      _
    // Predicated region
    $region22: #{state_critic_forward.1} parent=1 // pred_check
      _
    $region23: #{state_critic_forward.1} parent=1 // pred_check_branch
      %85 = sbr.rel (0) target = $region25
    $region24: #{state_critic_forward.1} parent=1 // pred_region
      _
    $region25: #{state_critic_forward.1} parent=1 // pred_fallthru
      _
    // Predicated region
    $region26: #{state_critic_forward.1} parent=1 // pred_check
      _
    $region27: #{state_critic_forward.1} parent=1 // pred_check_branch
      %87 = sbr.rel (0) target = $region29
    $region28: #{state_critic_forward.1} parent=1 // pred_region
      %89 = vsyncadd [#allocation12], 0
      %s90 = sshll.u32 %s6, 4
      %s91 = int_to_ptr.hbm [resolvable:$true] %s90
      %s92 = sshll.u32 [#allocation11], 4
      %s93 = int_to_ptr.vmem [resolvable:$true] %s92
      %98 = dma.hbm_to_vmem [thread:$0]  %s91, 512, %s93, [#allocation12], 128, 128, 8
    $region29: #{state_critic_forward.1} parent=1 // pred_fallthru
      _
    // Predicated region
    $region30: #{state_critic_forward.1} parent=1 // pred_check
      _
    $region31: #{state_critic_forward.1} parent=1 // pred_check_branch
      %100 = sbr.rel (0) target = $region33
    $region32: #{state_critic_forward.1} parent=1 // pred_region
      %102 = vsyncadd [#allocation12], 0
      %s103 = sshll.u32 %s7, 4
      %s104 = int_to_ptr.hbm [resolvable:$true] %s103
      %s105 = sshll.u32 [#allocation13], 4
      %s106 = int_to_ptr.vmem [resolvable:$true] %s105
      %111 = dma.hbm_to_vmem [thread:$0]  %s104, 512, %s106, [#allocation12], 128, 128, 8
    $region33: #{state_critic_forward.1} parent=1 // pred_fallthru
      _
    // Predicated region
    $region34: #{state_critic_forward.1} parent=1 // pred_check
      _
    $region35: #{state_critic_forward.1} parent=1 // pred_check_branch
      %113 = sbr.rel (0) target = $region37
    $region36: #{state_critic_forward.1} parent=1 // pred_region
      _
    $region37: #{state_critic_forward.1} parent=1 // pred_fallthru
      _
    // Predicated region
    $region38: #{state_critic_forward.1} parent=1 // pred_check
      _
    $region39: #{state_critic_forward.1} parent=1 // pred_check_branch
      %115 = sbr.rel (0) target = $region41
    $region40: #{state_critic_forward.1} parent=1 // pred_region
      %117 = vsyncadd [#allocation15], 0
      %s118 = sshll.u32 %s9, 4
      %s119 = int_to_ptr.hbm [resolvable:$true] %s118
      %s120 = sshll.u32 [#allocation14], 4
      %s121 = int_to_ptr.vmem [resolvable:$true] %s120
      %126 = dma.hbm_to_vmem [thread:$0]  %s119, 384, %s121, [#allocation15], 128, 128, 8
    $region41: #{state_critic_forward.1} parent=1 // pred_fallthru
      _
    // Predicated region
    $region42: #{state_critic_forward.1} parent=1 // pred_check
      _
    $region43: #{state_critic_forward.1} parent=1 // pred_check_branch
      %128 = sbr.rel (0) target = $region45
    $region44: #{state_critic_forward.1} parent=1 // pred_region
      _
    $region45: #{state_critic_forward.1} parent=1 // pred_fallthru
      _
    // Predicated region
    $region46: #{state_critic_forward.1} parent=1 // pred_check
      _
    $region47: #{state_critic_forward.1} parent=1 // pred_check_branch
      %130 = sbr.rel (0) target = $region49
    $region48: #{state_critic_forward.1} parent=1 // pred_region
      %132 = vsyncadd [#allocation15], 0
      %s133 = sshll.u32 %s11, 4
      %s134 = int_to_ptr.hbm [resolvable:$true] %s133
      %s135 = sshll.u32 [#allocation16], 4
      %s136 = int_to_ptr.vmem [resolvable:$true] %s135
      %141 = dma.hbm_to_vmem [thread:$0]  %s134, 384, %s136, [#allocation15], 128, 128, 8
    $region49: #{state_critic_forward.1} parent=1 // pred_fallthru
      _
    // Predicated region
    $region50: #{state_critic_forward.1} parent=1 // pred_check
      _
    $region51: #{state_critic_forward.1} parent=1 // pred_check_branch
      %143 = sbr.rel (0) target = $region53
    $region52: #{state_critic_forward.1} parent=1 // pred_region
      _
    $region53: #{state_critic_forward.1} parent=1 // pred_fallthru
      _
    // Predicated region
    $region54: #{state_critic_forward.1} parent=1 // pred_check
      _
    $region55: #{state_critic_forward.1} parent=1 // pred_check_branch
      %145 = sbr.rel (0) target = $region57
    $region56: #{state_critic_forward.1} parent=1 // pred_region
      %147 = dma.done [#allocation4], 128
    $region57: #{state_critic_forward.1} parent=1 // pred_fallthru
      _
    // Predicated region
    $region58: #{state_critic_forward.1} parent=1 // pred_check
      _
    $region59: #{state_critic_forward.1} parent=1 // pred_check_branch
      %149 = sbr.rel (0) target = $region61
    $region60: #{state_critic_forward.1} parent=1 // pred_region
      %151 = dma.done [#allocation6], 128
    $region61: #{state_critic_forward.1} parent=1 // pred_fallthru
      _
    // Predicated region
    $region62: #{state_critic_forward.1} parent=1 // pred_check
      _
    $region63: #{state_critic_forward.1} parent=1 // pred_check_branch
      %153 = sbr.rel (0) target = $region65
    $region64: #{state_critic_forward.1} parent=1 // pred_region
      %155 = dma.done [#allocation6], 64
    $region65: #{state_critic_forward.1} parent=1 // pred_fallthru
      _
    // Predicated region
    $region66: #{state_critic_forward.1} parent=1 // pred_check
      _
    $region67: #{state_critic_forward.1} parent=1 // pred_check_branch
      %157 = sbr.rel (0) target = $region69
    $region68: #{state_critic_forward.1} parent=1 // pred_region
      %159 = dma.done [#allocation9], 16
    $region69: #{state_critic_forward.1} parent=1 // pred_fallthru
      _
    // Predicated region
    $region70: #{state_critic_forward.1} parent=1 // pred_check
      _
    $region71: #{state_critic_forward.1} parent=1 // pred_check_branch
      %161 = sbr.rel (0) target = $region73
    $region72: #{state_critic_forward.1} parent=1 // pred_region
      %163 = dma.done [#allocation9], 64
    $region73: #{state_critic_forward.1} parent=1 // pred_fallthru
      _
    // Predicated region
    $region74: #{state_critic_forward.1} parent=1 // pred_check
      _
    $region75: #{state_critic_forward.1} parent=1 // pred_check_branch
      %165 = sbr.rel (0) target = $region77
    $region76: #{state_critic_forward.1} parent=1 // pred_region
      %167 = dma.done [#allocation12], 512
    $region77: #{state_critic_forward.1} parent=1 // pred_fallthru
      _
    // Predicated region
    $region78: #{state_critic_forward.1} parent=1 // pred_check
      _
    $region79: #{state_critic_forward.1} parent=1 // pred_check_branch
      %169 = sbr.rel (0) target = $region81
    $region80: #{state_critic_forward.1} parent=1 // pred_region
      %171 = dma.done [#allocation12], 512
    $region81: #{state_critic_forward.1} parent=1 // pred_fallthru
      _
    // Predicated region
    $region82: #{state_critic_forward.1} parent=1 // pred_check
      _
    $region83: #{state_critic_forward.1} parent=1 // pred_check_branch
      %173 = sbr.rel (0) target = $region85
    $region84: #{state_critic_forward.1} parent=1 // pred_region
      %175 = dma.done [#allocation15], 384
    $region85: #{state_critic_forward.1} parent=1 // pred_fallthru
      _
    // Predicated region
    $region86: #{state_critic_forward.1} parent=1 // pred_check
      _
    $region87: #{state_critic_forward.1} parent=1 // pred_check_branch
      %177 = sbr.rel (0) target = $region89
    $region88: #{state_critic_forward.1} parent=1 // pred_region
      %179 = dma.done [#allocation15], 384
    $region89: #{state_critic_forward.1} parent=1 // pred_fallthru
      _
    %v180 = vld [vmem:[#allocation3] sm:$0xf]
    %v181 = vld [vmem:[#allocation3 + $0x4] sm:$0xf]
    %182 = vxpose.xlu0.b32.start [1/16] %v180, 128
    %183 = vxpose.xlu0.b32.cont [2/16] 0.0, 128
    %184 = vxpose.xlu0.b32.cont [3/16] 0.0, 128
    %185 = vxpose.xlu0.b32.cont [4/16] 0.0, 128
    %186 = vxpose.xlu0.b32.cont [5/16] 0.0, 128
    %187 = vxpose.xlu0.b32.cont [6/16] 0.0, 128
    %188 = vxpose.xlu0.b32.cont [7/16] 0.0, 128
    %189 = vxpose.xlu0.b32.cont [8/16] 0.0, 128
    %190 = vxpose.xlu0.b32.cont [9/16] 0.0, 128
    %191 = vxpose.xlu0.b32.cont [10/16] 0.0, 128
    %192 = vxpose.xlu0.b32.cont [11/16] 0.0, 128
    %193 = vxpose.xlu0.b32.cont [12/16] 0.0, 128
    %194 = vxpose.xlu0.b32.cont [13/16] 0.0, 128
    %195 = vxpose.xlu0.b32.cont [14/16] 0.0, 128
    %196 = vxpose.xlu0.b32.cont [15/16] 0.0, 128
    %197 = vxpose.xlu0.b32.end [16/16] 0.0, 128
    %v198 = vpop.trf.xlu0
    %v199 = vpop.trf.xlu0
    %v200 = vpop.trf.xlu0
    %v201 = vpop.trf.xlu0
    %v202 = vpop.trf.xlu0
    %v203 = vpop.trf.xlu0
    %v204 = vpop.trf.xlu0
    %v205 = vpop.trf.xlu0
    %v206 = vpop.trf.xlu0
    %v207 = vpop.trf.xlu0
    %v208 = vpop.trf.xlu0
    %v209 = vpop.trf.xlu0
    %v210 = vpop.trf.xlu0
    %v211 = vpop.trf.xlu0
    %v212 = vpop.trf.xlu0
    %v213 = vpop.trf.xlu0
    %214 = vxpose.xlu0.b32.start [1/16] %v181, 128
    %215 = vxpose.xlu0.b32.cont [2/16] 0.0, 128
    %216 = vxpose.xlu0.b32.cont [3/16] 0.0, 128
    %217 = vxpose.xlu0.b32.cont [4/16] 0.0, 128
    %218 = vxpose.xlu0.b32.cont [5/16] 0.0, 128
    %219 = vxpose.xlu0.b32.cont [6/16] 0.0, 128
    %220 = vxpose.xlu0.b32.cont [7/16] 0.0, 128
    %221 = vxpose.xlu0.b32.cont [8/16] 0.0, 128
    %222 = vxpose.xlu0.b32.cont [9/16] 0.0, 128
    %223 = vxpose.xlu0.b32.cont [10/16] 0.0, 128
    %224 = vxpose.xlu0.b32.cont [11/16] 0.0, 128
    %225 = vxpose.xlu0.b32.cont [12/16] 0.0, 128
    %226 = vxpose.xlu0.b32.cont [13/16] 0.0, 128
    %227 = vxpose.xlu0.b32.cont [14/16] 0.0, 128
    %228 = vxpose.xlu0.b32.cont [15/16] 0.0, 128
    %229 = vxpose.xlu0.b32.end [16/16] 0.0, 128
    %v230 = vpop.trf.xlu0
    %v231 = vpop.trf.xlu0
    %v232 = vpop.trf.xlu0
    %v233 = vpop.trf.xlu0
    %v234 = vpop.trf.xlu0
    %v235 = vpop.trf.xlu0
    %v236 = vpop.trf.xlu0
    %v237 = vpop.trf.xlu0
    %v238 = vpop.trf.xlu0
    %v239 = vpop.trf.xlu0
    %v240 = vpop.trf.xlu0
    %v241 = vpop.trf.xlu0
    %v242 = vpop.trf.xlu0
    %v243 = vpop.trf.xlu0
    %v244 = vpop.trf.xlu0
    %v245 = vpop.trf.xlu0
    %v246 = vld [vmem:[#allocation5] sm:$0xf]
    %v247 = vld [vmem:[#allocation5 + $0x4] sm:$0xf]
    %248 = vxpose.xlu0.b32.start [1/16] %v246, 128
    %249 = vxpose.xlu0.b32.cont [2/16] 0.0, 128
    %250 = vxpose.xlu0.b32.cont [3/16] 0.0, 128
    %251 = vxpose.xlu0.b32.cont [4/16] 0.0, 128
    %252 = vxpose.xlu0.b32.cont [5/16] 0.0, 128
    %253 = vxpose.xlu0.b32.cont [6/16] 0.0, 128
    %254 = vxpose.xlu0.b32.cont [7/16] 0.0, 128
    %255 = vxpose.xlu0.b32.cont [8/16] 0.0, 128
    %256 = vxpose.xlu0.b32.cont [9/16] 0.0, 128
    %257 = vxpose.xlu0.b32.cont [10/16] 0.0, 128
    %258 = vxpose.xlu0.b32.cont [11/16] 0.0, 128
    %259 = vxpose.xlu0.b32.cont [12/16] 0.0, 128
    %260 = vxpose.xlu0.b32.cont [13/16] 0.0, 128
    %261 = vxpose.xlu0.b32.cont [14/16] 0.0, 128
    %262 = vxpose.xlu0.b32.cont [15/16] 0.0, 128
    %263 = vxpose.xlu0.b32.end [16/16] 0.0, 128
    %v264 = vpop.trf.xlu0
    %v265 = vpop.trf.xlu0
    %v266 = vpop.trf.xlu0
    %v267 = vpop.trf.xlu0
    %v268 = vpop.trf.xlu0
    %v269 = vpop.trf.xlu0
    %v270 = vpop.trf.xlu0
    %v271 = vpop.trf.xlu0
    %v272 = vpop.trf.xlu0
    %v273 = vpop.trf.xlu0
    %v274 = vpop.trf.xlu0
    %v275 = vpop.trf.xlu0
    %v276 = vpop.trf.xlu0
    %v277 = vpop.trf.xlu0
    %v278 = vpop.trf.xlu0
    %v279 = vpop.trf.xlu0
    %280 = vxpose.xlu0.b32.start [1/16] %v247, 128
    %281 = vxpose.xlu0.b32.cont [2/16] 0.0, 128
    %282 = vxpose.xlu0.b32.cont [3/16] 0.0, 128
    %283 = vxpose.xlu0.b32.cont [4/16] 0.0, 128
    %284 = vxpose.xlu0.b32.cont [5/16] 0.0, 128
    %285 = vxpose.xlu0.b32.cont [6/16] 0.0, 128
    %286 = vxpose.xlu0.b32.cont [7/16] 0.0, 128
    %287 = vxpose.xlu0.b32.cont [8/16] 0.0, 128
    %288 = vxpose.xlu0.b32.cont [9/16] 0.0, 128
    %289 = vxpose.xlu0.b32.cont [10/16] 0.0, 128
    %290 = vxpose.xlu0.b32.cont [11/16] 0.0, 128
    %291 = vxpose.xlu0.b32.cont [12/16] 0.0, 128
    %292 = vxpose.xlu0.b32.cont [13/16] 0.0, 128
    %293 = vxpose.xlu0.b32.cont [14/16] 0.0, 128
    %294 = vxpose.xlu0.b32.cont [15/16] 0.0, 128
    %295 = vxpose.xlu0.b32.end [16/16] 0.0, 128
    %v296 = vpop.trf.xlu0
    %v297 = vpop.trf.xlu0
    %v298 = vpop.trf.xlu0
    %v299 = vpop.trf.xlu0
    %v300 = vpop.trf.xlu0
    %v301 = vpop.trf.xlu0
    %v302 = vpop.trf.xlu0
    %v303 = vpop.trf.xlu0
    %v304 = vpop.trf.xlu0
    %v305 = vpop.trf.xlu0
    %v306 = vpop.trf.xlu0
    %v307 = vpop.trf.xlu0
    %v308 = vpop.trf.xlu0
    %v309 = vpop.trf.xlu0
    %v310 = vpop.trf.xlu0
    %v311 = vpop.trf.xlu0
    %v312 = vld [vmem:[#allocation7] sm:$0xf]
    %v313 = vld [vmem:[#allocation8] sm:$0x1]
    %v315 = vperm.slane %v313, 0
    %vm317 = vcmask 31744
    %v319 = vsel %vm317, %v198, 0
    %v322 = vsel %vm317, %v199, 0
    %v325 = vsel %vm317, %v230, 0
    %v328 = vsel %vm317, %v231, 0
    %vm330 = vcmask 1043456
    %v332 = vsel %vm330, %v312, 0
    %334 = vmatpush.msra.mxu0 0.0
    %335 = vmatpush.msra.mxu0 0.0
    %336 = vmatpush.msra.mxu0 0.0
    %337 = vmatpush.msra.mxu0 0.0
    %338 = vmatpush.msra.mxu0 0.0
    %339 = vmatpush.msra.mxu0 0.0
    %340 = vmatpush.msra.mxu0 0.0
    %341 = vmatpush.msra.mxu0 0.0
    %342 = vmatpush.msra.mxu0 0.0
    %343 = vmatpush.msra.mxu0 0.0
    %344 = vmatpush.msra.mxu0 0.0
    %345 = vmatpush.msra.mxu0 0.0
    %346 = vmatpush.msra.mxu0 0.0
    %347 = vmatpush.msra.mxu0 0.0
    %348 = vmatpush.msra.mxu0 0.0
    %349 = vmatpush.msra.mxu0 %v332
    %350 = vmatmul.f32.gmra.mxu0 %v319
    %v351 = vpop.f32.mrf.mxu0
    %v352 = vadd.f32 %v315, %v351
    %353 = vmatmul.f32.gmra.mxu0 %v322
    %v354 = vpop.f32.mrf.mxu0
    %v355 = vadd.f32 %v315, %v354
    %356 = vmatmul.f32.gmra.mxu0 %v325
    %v357 = vpop.f32.mrf.mxu0
    %v358 = vadd.f32 %v315, %v357
    %359 = vmatmul.f32.gmra.mxu0 %v328
    %v360 = vpop.f32.mrf.mxu0
    %v361 = vadd.f32 %v315, %v360
    %362 = vdwg.mxu0
    %v363 = vld [vmem:[#allocation10] sm:$0xf]
    %v364 = vld [vmem:[%s5] sm:$0x1]
    %v366 = vperm.slane %v364, 0
    %v369 = vsel %vm317, %v264, 0
    %v372 = vsel %vm317, %v265, 0
    %v375 = vsel %vm317, %v296, 0
    %v378 = vsel %vm317, %v297, 0
    %v381 = vsel %vm330, %v363, 0
    %383 = vmatpush.msra.mxu0 0.0
    %384 = vmatpush.msra.mxu0 0.0
    %385 = vmatpush.msra.mxu0 0.0
    %386 = vmatpush.msra.mxu0 0.0
    %387 = vmatpush.msra.mxu0 0.0
    %388 = vmatpush.msra.mxu0 0.0
    %389 = vmatpush.msra.mxu0 0.0
    %390 = vmatpush.msra.mxu0 0.0
    %391 = vmatpush.msra.mxu0 0.0
    %392 = vmatpush.msra.mxu0 0.0
    %393 = vmatpush.msra.mxu0 0.0
    %394 = vmatpush.msra.mxu0 0.0
    %395 = vmatpush.msra.mxu0 0.0
    %396 = vmatpush.msra.mxu0 0.0
    %397 = vmatpush.msra.mxu0 0.0
    %398 = vmatpush.msra.mxu0 %v381
    %399 = vmatmul.f32.gmra.mxu0 %v369
    %v400 = vpop.f32.mrf.mxu0
    %v401 = vadd.f32 %v366, %v400
    %402 = vmatmul.f32.gmra.mxu0 %v372
    %v403 = vpop.f32.mrf.mxu0
    %v404 = vadd.f32 %v366, %v403
    %405 = vmatmul.f32.gmra.mxu0 %v375
    %v406 = vpop.f32.mrf.mxu0
    %v407 = vadd.f32 %v366, %v406
    %408 = vmatmul.f32.gmra.mxu0 %v378
    %v409 = vpop.f32.mrf.mxu0
    %v410 = vadd.f32 %v366, %v409
    %411 = vdwg.mxu0
    %v412 = vld [vmem:[#allocation11] sm:$0xff]
    %v413 = vld [vmem:[#allocation11 + $0x8] sm:$0xff]
    %v414 = vld [vmem:[#allocation11 + $0x10] sm:$0xff]
    %v415 = vld [vmem:[#allocation11 + $0x18] sm:$0xff]
    %v416 = vld [vmem:[#allocation13] sm:$0xff]
    %v417 = vld [vmem:[#allocation13 + $0x8] sm:$0xff]
    %v418 = vld [vmem:[#allocation13 + $0x10] sm:$0xff]
    %v419 = vld [vmem:[#allocation13 + $0x18] sm:$0xff]
    %vm420 = vcmask 261120
    %v422 = vsel %vm420, %v401, 0
    %v425 = vsel %vm420, %v404, 0
    %v428 = vsel %vm420, %v407, 0
    %v431 = vsel %vm420, %v410, 0
    %433 = vmatpush.msra.mxu0 0.0
    %434 = vmatpush.msra.mxu0 0.0
    %435 = vmatpush.msra.mxu0 0.0
    %436 = vmatpush.msra.mxu0 0.0
    %437 = vmatpush.msra.mxu0 0.0
    %438 = vmatpush.msra.mxu0 0.0
    %439 = vmatpush.msra.mxu0 0.0
    %440 = vmatpush.msra.mxu0 0.0
    %441 = vmatpush.msra.mxu0 0.0
    %442 = vmatpush.msra.mxu0 0.0
    %443 = vmatpush.msra.mxu0 0.0
    %444 = vmatpush.msra.mxu0 0.0
    %445 = vmatpush.msra.mxu0 %v419
    %446 = vmatpush.msra.mxu0 %v418
    %447 = vmatpush.msra.mxu0 %v417
    %448 = vmatpush.msra.mxu0 %v416
    %449 = vmatmul.f32.gmra.mxu0 %v422
    %v450 = vpop.f32.mrf.mxu0
    %v451 = vadd.f32 0.0, %v450
    %452 = vmatmul.f32.gmra.mxu0 %v425
    %v453 = vpop.f32.mrf.mxu0
    %v454 = vadd.f32 0.0, %v453
    %455 = vmatmul.f32.gmra.mxu0 %v428
    %v456 = vpop.f32.mrf.mxu0
    %v457 = vadd.f32 0.0, %v456
    %458 = vmatmul.f32.gmra.mxu0 %v431
    %v459 = vpop.f32.mrf.mxu0
    %v460 = vadd.f32 0.0, %v459
    %461 = vdwg.mxu0
    %v463 = vsel %vm420, %v352, 0
    %v466 = vsel %vm420, %v355, 0
    %v469 = vsel %vm420, %v358, 0
    %v472 = vsel %vm420, %v361, 0
    %474 = vmatpush.msra.mxu0 0.0
    %475 = vmatpush.msra.mxu0 0.0
    %476 = vmatpush.msra.mxu0 0.0
    %477 = vmatpush.msra.mxu0 0.0
    %478 = vmatpush.msra.mxu0 0.0
    %479 = vmatpush.msra.mxu0 0.0
    %480 = vmatpush.msra.mxu0 0.0
    %481 = vmatpush.msra.mxu0 0.0
    %482 = vmatpush.msra.mxu0 0.0
    %483 = vmatpush.msra.mxu0 0.0
    %484 = vmatpush.msra.mxu0 0.0
    %485 = vmatpush.msra.mxu0 0.0
    %486 = vmatpush.msra.mxu0 %v415
    %487 = vmatpush.msra.mxu0 %v414
    %488 = vmatpush.msra.mxu0 %v413
    %489 = vmatpush.msra.mxu0 %v412
    %490 = vmatmul.f32.gmra.mxu0 %v463
    %v491 = vpop.f32.mrf.mxu0
    %v492 = vadd.f32 %v451, %v491
    %493 = vmatmul.f32.gmra.mxu0 %v466
    %v494 = vpop.f32.mrf.mxu0
    %v495 = vadd.f32 %v454, %v494
    %496 = vmatmul.f32.gmra.mxu0 %v469
    %v497 = vpop.f32.mrf.mxu0
    %v498 = vadd.f32 %v457, %v497
    %499 = vmatmul.f32.gmra.mxu0 %v472
    %v500 = vpop.f32.mrf.mxu0
    %v501 = vadd.f32 %v460, %v500
    %502 = vdwg.mxu0
    %v503 = vld [vmem:[%s8] sm:$0x1]
    %v505 = vperm.slane %v503, 0
    %v507 = vadd.f32 %v492, %v505
    %v508 = vadd.f32 %v495, %v505
    %v509 = vadd.f32 %v498, %v505
    %v510 = vadd.f32 %v501, %v505
    %v511 = vmax.f32 %v507, 0.0
    %v512 = vmax.f32 %v508, 0.0
    %v513 = vmax.f32 %v509, 0.0
    %v514 = vmax.f32 %v510, 0.0
    %v515 = vld [vmem:[#allocation14] sm:$0xff]
    %v516 = vld [vmem:[#allocation14 + $0x8] sm:$0xff]
    %v517 = vld [vmem:[#allocation14 + $0x10] sm:$0xf]
    %v518 = vld [vmem:[%s10] sm:$0x1]
    %v520 = vperm.slane %v518, 0
    %vm522 = vcmask 162816
    %v524 = vsel %vm522, %v511, 0
    %v527 = vsel %vm522, %v512, 0
    %v530 = vsel %vm522, %v513, 0
    %v533 = vsel %vm522, %v514, 0
    %v536 = vsel %vm330, %v517, 0
    %538 = vmatpush.msra.mxu0 0.0
    %539 = vmatpush.msra.mxu0 0.0
    %540 = vmatpush.msra.mxu0 0.0
    %541 = vmatpush.msra.mxu0 0.0
    %542 = vmatpush.msra.mxu0 0.0
    %543 = vmatpush.msra.mxu0 0.0
    %544 = vmatpush.msra.mxu0 0.0
    %545 = vmatpush.msra.mxu0 0.0
    %546 = vmatpush.msra.mxu0 0.0
    %547 = vmatpush.msra.mxu0 0.0
    %548 = vmatpush.msra.mxu0 0.0
    %549 = vmatpush.msra.mxu0 0.0
    %550 = vmatpush.msra.mxu0 0.0
    %551 = vmatpush.msra.mxu0 %v536
    %552 = vmatpush.msra.mxu0 %v516
    %553 = vmatpush.msra.mxu0 %v515
    %554 = vmatmul.f32.gmra.mxu0 %v524
    %v555 = vpop.f32.mrf.mxu0
    %v556 = vadd.f32 %v520, %v555
    %557 = vmatmul.f32.gmra.mxu0 %v527
    %v558 = vpop.f32.mrf.mxu0
    %v559 = vadd.f32 %v520, %v558
    %560 = vmatmul.f32.gmra.mxu0 %v530
    %v561 = vpop.f32.mrf.mxu0
    %v562 = vadd.f32 %v520, %v561
    %563 = vmatmul.f32.gmra.mxu0 %v533
    %v564 = vpop.f32.mrf.mxu0
    %v565 = vadd.f32 %v520, %v564
    %566 = vdwg.mxu0
    %v567 = vmax.f32 %v556, 0.0
    %v568 = vmax.f32 %v559, 0.0
    %v569 = vmax.f32 %v562, 0.0
    %v570 = vmax.f32 %v565, 0.0
    %v571 = vsel %vm522, %v567, 0.0
    %v572 = vsel %vm522, %v568, 0.0
    %v573 = vadd.f32 %v571, %v572
    %v574 = vrot.slane %v573, 4
    %v575 = vadd.f32 %v573, %v574
    %v576 = vrot.slane %v575, 2
    %v577 = vadd.f32 %v575, %v576
    %v578 = vrot.slane %v577, 1
    %v579 = vadd.f32 %v577, %v578
    %v580 = vsel %vm522, %v569, 0.0
    %v581 = vsel %vm522, %v570, 0.0
    %v582 = vadd.f32 %v580, %v581
    %v583 = vrot.slane %v582, 4
    %v584 = vadd.f32 %v582, %v583
    %v585 = vrot.slane %v584, 2
    %v586 = vadd.f32 %v584, %v585
    %v587 = vrot.slane %v586, 1
    %v588 = vadd.f32 %v586, %v587
    %v589 = vld [vmem:[#allocation16] sm:$0xff]
    %v590 = vld [vmem:[#allocation16 + $0x8] sm:$0xff]
    %v591 = vld [vmem:[#allocation16 + $0x10] sm:$0xf]
    %v592 = vld [vmem:[#allocation2] sm:$0x1]
    %v593 = vmul.f32 %v592, 16.0
    %v595 = vperm.slane %v593, 0
    %vm599 = vcmask 1041409
    %v600 = vsel %vm599, %v588, %v579
    %v601 = vsel %vm522, %v600, 0
    %v604 = vsel %vm330, %v591, 0
    %606 = vmatpush.msra.mxu0 0.0
    %607 = vmatpush.msra.mxu0 0.0
    %608 = vmatpush.msra.mxu0 0.0
    %609 = vmatpush.msra.mxu0 0.0
    %610 = vmatpush.msra.mxu0 0.0
    %611 = vmatpush.msra.mxu0 0.0
    %612 = vmatpush.msra.mxu0 0.0
    %613 = vmatpush.msra.mxu0 0.0
    %614 = vmatpush.msra.mxu0 0.0
    %615 = vmatpush.msra.mxu0 0.0
    %616 = vmatpush.msra.mxu0 0.0
    %617 = vmatpush.msra.mxu0 0.0
    %618 = vmatpush.msra.mxu0 0.0
    %619 = vmatpush.msra.mxu0 %v604
    %620 = vmatpush.msra.mxu0 %v590
    %621 = vmatpush.msra.mxu0 %v589
    %622 = vmatmul.f32.gmra.mxu0 %v601
    %v623 = vpop.f32.mrf.mxu0
    %v624 = vadd.f32 %v595, %v623
    %625 = vdwg.mxu0
    %vm626 = vcmask 1024
    %627 = vst.msk [vmem:[%s13] sm:$0x3] %vm626, %v624
    // Predicated region
    $region90: #{state_critic_forward.1} parent=1 // pred_check
      _
    $region91: #{state_critic_forward.1} parent=1 // pred_check_branch
      %629 = sbr.rel (0) target = $region93
    $region92: #{state_critic_forward.1} parent=1 // pred_region
      _
    $region93: #{state_critic_forward.1} parent=1 // pred_fallthru
      _
    // Predicated region
    $region94: #{state_critic_forward.1} parent=1 // pred_check
      _
    $region95: #{state_critic_forward.1} parent=1 // pred_check_branch
      %631 = sbr.rel (0) target = $region97
    $region96: #{state_critic_forward.1} parent=1 // pred_region
      _
    $region97: #{state_critic_forward.1} parent=1 // pred_fallthru
      _
    %632 = vsyncpa [#allocation4], 1
    %633 = vsyncpa [#allocation6], 1
    %634 = vsyncpa [#allocation9], 1
    %635 = vsyncpa [#allocation12], 1
    %636 = vsyncpa [#allocation15], 1

</llo_original>
